<compile_context>
chip_gen: v5e
topology: v5e:2x2
jax: 0.10.0
libtpu: 0.0.40
codegen_flags: <defaults>
</compile_context>

<pallas_src>
import functools

import jax
import jax.numpy as jnp
from jax.experimental import pallas as pl
from jax.experimental.pallas import tpu as pltpu


def _round_up(x, m):
    return ((x + m - 1) // m) * m


def _bpr_logsig_kernel(wu_ref, hd_ref, out_ref, *, true_b, tile_b):
    """One batch tile: lane-dense (D, TB) inputs, (1, TB) output.

    Computes x_uij = sum_d W[u] * (H[i] - H[j]) per batch column (sublane
    reduce), then a numerically stable log(sigmoid(x_uij)).  Lanes past the
    true batch size (partial tail block) are masked to 0 before the store.
    """
    tile = pl.program_id(0)
    wu = wu_ref[...].astype(jnp.float32)                       # (D, TB)
    hd = hd_ref[...].astype(jnp.float32)                       # (D, TB)
    x_uij = jnp.sum(wu * hd, axis=0, keepdims=True)            # (1, TB)

    lane = jax.lax.broadcasted_iota(jnp.int32, x_uij.shape, dimension=1)
    valid = (tile * tile_b + lane) < true_b                    # mask tail lanes

    x = jnp.where(valid, x_uij, 0.0)                           # kill garbage
    logsig = jnp.minimum(x, 0.0) - jnp.log1p(jnp.exp(-jnp.abs(x)))
    out_ref[...] = jnp.where(valid, logsig, 0.0)


def _pick_tile_and_vmem(B, D, itemsize, n_inputs=2):
    """Adaptive lane-dense batch tile + explicit scoped-VMEM limit."""
    try:
        phys_vmem = pltpu.get_tpu_info().vmem_capacity_bytes   # 64 MiB v7x, 128 MiB v5e/v6e
    except Exception:
        phys_vmem = 64 << 20
    budget = min(phys_vmem // 4, 16 << 20)                     # conservative on all gens

    # inputs double-buffered in table dtype + f32 output row double-buffered
    bytes_per_col = n_inputs * 2 * D * itemsize + 2 * 4
    tb = budget // max(bytes_per_col, 1)
    tb = max(2048, min(int(tb), 16384))

    # Keep the grid at >= 2 steps so 'parallel' actually splits across the two
    # v7x TensorCores (no-op on v5e/v6e; also handles tiny B).
    tb = min(tb, _round_up(max(1, (B + 1) // 2), 128))
    tb = max(128, (tb // 128) * 128)

    vmem_used = 2 * (n_inputs * D * tb * itemsize + tb * 4)
    vmem_limit = int(min(max(2 * vmem_used, 16 << 20), 100 << 20))
    return tb, vmem_limit


def bpr_forward(W, H, u, i, j):
    """Pallas implementation of BPR.forward(u, i, j). Returns scalar f32."""
    B = u.shape[0]
    D = W.shape[1]
    itemsize = jnp.dtype(W.dtype).itemsize

    # Gather + algebraic fusion (H[i]-H[j]) in plain JAX glue; keep the table
    # dtype through the DMA (upcast happens inside the kernel).
    # NOTE: verify in the HLO that the .T fuses into the gather; for small D
    # (e.g. 32) a gather-in-JAX pass is the right call.
    # TODO(synk): for large D / huge tables, scalar-prefetch u/i/j and DMA-gather
    # rows in-kernel (memory_space=pl.ANY + make_async_copy) to avoid these
    # materialized (D, B) intermediates entirely.
    wuT = W[u, :].T                                            # (D, B) table dtype
    hdT = (H[i, :] - H[j, :]).T                                # (D, B) table dtype

    tb, vmem_limit = _pick_tile_and_vmem(B, D, itemsize, n_inputs=2)
    n_tiles = pl.cdiv(B, tb)
    Bp = n_tiles * tb                                          # padded output cols only

    in_blk = pl.BlockSpec((D, tb), lambda b: (0, b))

    kernel = functools.partial(_bpr_logsig_kernel, true_b=B, tile_b=tb)

    logsig = pl.pallas_call(
        kernel,
        out_shape=jax.ShapeDtypeStruct((1, Bp), jnp.float32),
        grid_spec=pltpu.PrefetchScalarGridSpec(
            num_scalar_prefetch=0,
            grid=(n_tiles,),
            in_specs=[in_blk, in_blk],
            out_specs=pl.BlockSpec((1, tb), lambda b: (0, b)),
        ),
        compiler_params=pltpu.CompilerParams(
            dimension_semantics=("parallel",),                 # no carried state
            vmem_limit_bytes=vmem_limit,
        ),
    )(wuT, hdT)

    # Tail lanes were stored as exactly 0, so a full sum is safe; divisor is
    # the true batch size.
    return -(jnp.sum(logsig) / B)


def bpr_reference(W, H, u, i, j):
    """Pure-JAX reference mirroring the PyTorch module (stable log-sigmoid)."""
    x_ui = jnp.sum(W[u, :] * H[i, :], axis=1)
    x_uj = jnp.sum(W[u, :] * H[j, :], axis=1)
    x_uij = x_ui - x_uj
    return -jnp.mean(jax.nn.log_sigmoid(x_uij))


if __name__ == "__main__":
    user_size, item_size, dim = 10, 20, 32
    batch = 8

    key = jax.random.PRNGKey(0)
    k_w, k_h, k_u, k_i, k_j = jax.random.split(key, 5)

    # torch.rand -> uniform [0, 1)
    W = jax.random.uniform(k_w, (user_size, dim), dtype=jnp.float32)
    H = jax.random.uniform(k_h, (item_size, dim), dtype=jnp.float32)

    u = jax.random.randint(k_u, (batch,), 0, user_size, dtype=jnp.int32)
    i = jax.random.randint(k_i, (batch,), 0, item_size, dtype=jnp.int32)
    j = jax.random.randint(k_j, (batch,), 0, item_size, dtype=jnp.int32)

    loss = bpr_forward(W, H, u, i, j)
    loss = jax.block_until_ready(loss)

    ref = bpr_reference(W, H, u, i, j)
    assert jnp.allclose(loss, ref, rtol=1e-5, atol=1e-5), (loss, ref)

    print("KERNEL_OK")
</pallas_src>

<mosaic_0001>
module attributes {stable_mosaic.version = 11 : i64} {
  func.func @_bpr_logsig_kernel(%arg0: i32, %arg1: memref<32x128xf32, #tpu.memory_space<vmem>>, %arg2: memref<32x128xf32, #tpu.memory_space<vmem>>, %arg3: memref<1x128xf32, #tpu.memory_space<vmem>>) attributes {dimension_semantics = [#tpu.dimension_semantics<parallel>], iteration_bounds = array<i64: 1>, scalar_prefetch = 0 : i64, scratch_operands = 0 : i64, tpu.core_type = #tpu.core_type<tc>, window_params = [{transform_indices = @transform_0, window_bounds = array<i64: 32, 128>}, {transform_indices = @transform_1, window_bounds = array<i64: 32, 128>}, {transform_indices = @transform_2, window_bounds = array<i64: 1, 128>}]} {
    %c0 = arith.constant 0 : index
    %c0_0 = arith.constant 0 : index
    %0 = vector.load %arg1[%c0, %c0_0] : memref<32x128xf32, #tpu.memory_space<vmem>>, vector<32x128xf32>
    %c0_1 = arith.constant 0 : index
    %c0_2 = arith.constant 0 : index
    %1 = vector.load %arg2[%c0_1, %c0_2] : memref<32x128xf32, #tpu.memory_space<vmem>>, vector<32x128xf32>
    %2 = arith.mulf %0, %1 : vector<32x128xf32>
    %cst = arith.constant dense<0.000000e+00> : vector<128xf32>
    %3 = vector.multi_reduction <add>, %2, %cst [0] : vector<32x128xf32> to vector<128xf32>
    %4 = vector.shape_cast %3 : vector<128xf32> to vector<1x128xf32>
    %5 = tpu.iota {dimensions = array<i32: 1>} : vector<1x128xi32>
    %c128_i32 = arith.constant 128 : i32
    %6 = arith.muli %arg0, %c128_i32 : i32
    %7 = vector.broadcast %6 : i32 to vector<1x128xi32>
    %8 = arith.addi %7, %5 : vector<1x128xi32>
    %c8_i32 = arith.constant 8 : i32
    %9 = vector.broadcast %c8_i32 : i32 to vector<1x128xi32>
    %10 = arith.cmpi slt, %8, %9 : vector<1x128xi32>
    %cst_3 = arith.constant 0.000000e+00 : f32
    %11 = vector.broadcast %cst_3 : f32 to vector<1x128xf32>
    %12 = arith.select %10, %4, %11 : vector<1x128xi1>, vector<1x128xf32>
    %cst_4 = arith.constant 0.000000e+00 : f32
    %13 = vector.broadcast %cst_4 : f32 to vector<1x128xf32>
    %14 = arith.minimumf %12, %13 : vector<1x128xf32>
    %15 = math.absf %12 : vector<1x128xf32>
    %cst_5 = arith.constant 0.000000e+00 : f32
    %16 = vector.broadcast %cst_5 : f32 to vector<1x128xf32>
    %17 = arith.subf %16, %15 : vector<1x128xf32>
    %18 = math.exp %17 : vector<1x128xf32>
    %19 = math.log1p %18 : vector<1x128xf32>
    %20 = arith.subf %14, %19 : vector<1x128xf32>
    %cst_6 = arith.constant 0.000000e+00 : f32
    %21 = vector.broadcast %cst_6 : f32 to vector<1x128xf32>
    %22 = arith.select %10, %20, %21 : vector<1x128xi1>, vector<1x128xf32>
    %c0_7 = arith.constant 0 : index
    %c0_8 = arith.constant 0 : index
    %23 = vector.load %arg3[%c0_7, %c0_8] : memref<1x128xf32, #tpu.memory_space<vmem>>, vector<1x128xf32>
    tpu.vector_store %arg3[%c0_7, %c0_8], %22 {strides = array<i32>} : memref<1x128xf32, #tpu.memory_space<vmem>>, vector<1x128xf32>,
    return
  }
  func.func @transform_0(%arg0: i32) -> (i32, i32) {
    %c0_i32 = arith.constant 0 : i32
    %c0_i32_0 = arith.constant 0 : i32
    return %c0_i32, %arg0 : i32, i32
  }
  func.func @transform_1(%arg0: i32) -> (i32, i32) {
    %c0_i32 = arith.constant 0 : i32
    %c0_i32_0 = arith.constant 0 : i32
    return %c0_i32, %arg0 : i32, i32
  }
  func.func @transform_2(%arg0: i32) -> (i32, i32) {
    %c0_i32 = arith.constant 0 : i32
    %c0_i32_0 = arith.constant 0 : i32
    return %c0_i32, %arg0 : i32, i32
  }
}

</mosaic_0001>

<llo_original>
// kernel: tpu_custom_call.1
$region0: #{tpu_custom_call.1}
  #allocation0 [shape = 'u32[]', space=smem, size = 0x4, offset = 0x4, fixed_abs, tag = 'smem constant byte address 0x4 - core index']
  #allocation1 [shape = 'u32[72,128]{1,0:T(1,128)}', space=vmem, size = 0x9000, scoped, tag = 'internal scratch']
  %s0 = inlined_call_operand.vmem [shape: f32[32,8], index: 0, kind: input, shape index: {}]
  %s1 = inlined_call_operand.vmem [shape: f32[32,8], index: 1, kind: input, shape index: {}]
  %s2 = inlined_call_operand.hbm [shape: f32[1,128], index: 2, kind: output, shape index: {}]
  %s3 = sld [smem:[#allocation0]]
  $region18: #{tpu_custom_call.1} parent=0
    _
  %s5 = ssub.s32 1, %s3
  %s6 = scalar_select 0, %s5, %s3
  $region1: #{tpu_custom_call.1} parent=0
    #allocation2 [shape = 'u8[512]{0}', space=vmem, size = 0x400, scoped, tag = 'output window, operand 0, single buffered']
    #allocation3 [shape = 's32[1]{0}', space=sflag, size = 0x4, scoped, tag = 'scoped memory for tpu_custom_call.1']
    %7 = vsyncpa [#allocation3], 0
    // Predicated region
    $region2: #{tpu_custom_call.1} parent=1 // pred_check
      _
    $region3: #{tpu_custom_call.1} parent=1 // pred_check_branch
      %9 = sbr.rel (0) target = $region5
    $region4: #{tpu_custom_call.1} parent=1 // pred_region
      _
    $region5: #{tpu_custom_call.1} parent=1 // pred_fallthru
      _
    // Predicated region
    $region6: #{tpu_custom_call.1} parent=1 // pred_check
      _
    $region7: #{tpu_custom_call.1} parent=1 // pred_check_branch
      %11 = sbr.rel (0) target = $region9
    $region8: #{tpu_custom_call.1} parent=1 // pred_region
      _
    $region9: #{tpu_custom_call.1} parent=1 // pred_fallthru
      _
    %v12 = vld [vmem:[%s0] sm:$0xff]
    %v13 = vld [vmem:[%s0 + $0x8] sm:$0xff]
    %v14 = vld [vmem:[%s0 + $0x10] sm:$0xff]
    %v15 = vld [vmem:[%s0 + $0x18] sm:$0xff]
    %v16 = vld [vmem:[%s1] sm:$0xff]
    %v17 = vld [vmem:[%s1 + $0x8] sm:$0xff]
    %v18 = vld [vmem:[%s1 + $0x10] sm:$0xff]
    %v19 = vld [vmem:[%s1 + $0x18] sm:$0xff]
    %v20 = vmul.f32 %v12, %v16
    %v21 = vmul.f32 %v13, %v17
    %v22 = vmul.f32 %v14, %v18
    %v23 = vmul.f32 %v15, %v19
    %v24 = vadd.f32 %v20, %v21
    %v25 = vadd.f32 %v24, %v22
    %v26 = vadd.f32 %v25, %v23
    %v27 = vrot.slane %v26, 4
    %v28 = vadd.f32 %v26, %v27
    %v29 = vrot.slane %v28, 2
    %v30 = vadd.f32 %v28, %v29
    %v31 = vrot.slane %v30, 1
    %v32 = vadd.f32 %v30, %v31
    %v33 = vlaneseq
    %v34 = vand.u32 %v33, 127
    %s35 = smul.u32 0, 128
    %v36 = vstv %s35
    %v37 = vadd.s32 %v36, %v34
    %vm38 = vcmp.lt.s32.totalorder %v37, 8
    %v39 = vsel %vm38, %v32, 0.0
    %v40 = vmin.f32 %v39, 0.0
    %v41 = vand.u32 2147483647, %v39
    %v42 = vsub.f32 0.0, %v41
    %v43 = vmul.f32 %v42, 1.442695
    %v44 = vpow.pop %v43
    %v45 = vadd.f32 %v44, 1.0
    %v46 = vlog2.pop %v45
    %v47 = vmul.f32 %v46, 0.6931472
    %v48 = vmul.f32 -0.5, %v44
    %v49 = vadd.f32 %v48, 1.0
    %v50 = vmul.f32 %v49, %v44
    %v51 = vand.u32 2147483647, %v44
    %vm52 = vcmp.lt.f32.partialorder %v51, 0.0004427343
    %v53 = vsel %vm52, %v50, %v47
    %v54 = vsub.f32 %v40, %v53
    %v55 = vsel %vm38, %v54, 0.0
    %56 = vst [vmem:[#allocation2] sm:$0x1] %v55
    // Predicated region
    $region10: #{tpu_custom_call.1} parent=1 // pred_check
      _
    $region11: #{tpu_custom_call.1} parent=1 // pred_check_branch
      %58 = sbr.rel (0) target = $region13
    $region12: #{tpu_custom_call.1} parent=1 // pred_region
      %60 = vsyncadd [#allocation3], 0
      %s62 = sshll.u32 [#allocation2], 4
      %s63 = int_to_ptr.vmem [resolvable:$true] %s62
      %s64 = sshll.u32 %s2, 4
      %s65 = int_to_ptr.hbm [resolvable:$true] %s64
      %67 = dma.vmem_to_hbm [thread:$0]  %s63, 16, %s65, [#allocation3]
    $region13: #{tpu_custom_call.1} parent=1 // pred_fallthru
      _
    // Predicated region
    $region14: #{tpu_custom_call.1} parent=1 // pred_check
      _
    $region15: #{tpu_custom_call.1} parent=1 // pred_check_branch
      %69 = sbr.rel (0) target = $region17
    $region16: #{tpu_custom_call.1} parent=1 // pred_region
      %71 = dma.done [#allocation3], 16
    $region17: #{tpu_custom_call.1} parent=1 // pred_fallthru
      _
    %72 = vsyncpa [#allocation3], 1

</llo_original>
